<compile_context>
chip_gen: v5e
topology: v5e:2x2
jax: 0.10.0
libtpu: 0.0.40
codegen_flags: <defaults>
</compile_context>

<pallas_src>
import jax
import jax.numpy as jnp
from jax.experimental import pallas as pl
from jax.experimental.pallas import tpu as pltpu


# Below this size a Pallas custom call is pure overhead; let XLA copy instead.
_MIN_PALLAS_COPY_BYTES = 1 << 20        # 1 MiB
# Above this size, use multiple outstanding chunked DMAs.
_CHUNKED_DMA_THRESHOLD_BYTES = 8 << 20  # 8 MiB
_MAX_DMA_CHUNKS = 8


def _single_copy_kernel(x_hbm, o_hbm, sem):
    # One whole-array HBM->HBM DMA: no VMEM staging, no vld/vst traffic.
    cp = pltpu.make_async_copy(x_hbm, o_hbm, sem)
    cp.start()
    cp.wait()


def _make_chunked_copy_kernel(chunks):
    """Kernel with len(chunks) outstanding HBM->HBM DMAs (start-all/wait-all).

    `chunks` is a static tuple of (start, size) slices along the outermost
    dimension, so every descriptor is built with compile-time offsets.
    """

    def kernel(x_hbm, o_hbm, sems):
        copies = []
        for i, (start, size) in enumerate(chunks):
            cp = pltpu.make_async_copy(
                x_hbm.at[pl.ds(start, size)],
                o_hbm.at[pl.ds(start, size)],
                sems.at[i],
            )
            cp.start()          # issue all descriptors first ...
            copies.append(cp)
        for cp in copies:       # ... then wait on all of them.
            cp.wait()

    return kernel


def _materialized_identity_copy(x: jax.Array, *, force_chunks: int | None = None) -> jax.Array:
    """Exact copy of `x` produced by direct HBM->HBM DMA(s) (no VMEM staging)."""
    nbytes = x.size * x.dtype.itemsize
    bytes_accessed = 2 * nbytes  # full read + full write
    leading = x.shape[0] if x.ndim >= 1 else 0

    if force_chunks is not None:
        n_chunks = max(1, min(force_chunks, leading)) if leading >= 1 else 1
    elif nbytes >= _CHUNKED_DMA_THRESHOLD_BYTES and leading >= 2:
        n_chunks = min(_MAX_DMA_CHUNKS, leading)
    else:
        n_chunks = 1

    if n_chunks > 1:
        base, rem = divmod(leading, n_chunks)
        chunks, start = [], 0
        for i in range(n_chunks):
            size = base + (1 if i < rem else 0)
            chunks.append((start, size))
            start += size
        kernel = _make_chunked_copy_kernel(tuple(chunks))
        scratch_shapes = [pltpu.SemaphoreType.DMA((n_chunks,))]
    else:
        kernel = _single_copy_kernel
        scratch_shapes = [pltpu.SemaphoreType.DMA(())]

    return pl.pallas_call(
        kernel,
        out_shape=jax.ShapeDtypeStruct(x.shape, x.dtype),
        in_specs=[pl.BlockSpec(memory_space=pl.ANY)],   # input stays in HBM
        out_specs=pl.BlockSpec(memory_space=pl.ANY),    # output stays in HBM
        scratch_shapes=scratch_shapes,
        cost_estimate=pl.CostEstimate(
            flops=0, transcendentals=0, bytes_accessed=bytes_accessed
        ),
    )(x)


def identity_dna_feature_transformer(
    x: jax.Array,
    *,
    materialize: bool = False,
    min_pallas_bytes: int = _MIN_PALLAS_COPY_BYTES,
) -> jax.Array:
    """Pass-through transform (forward(x) == x), matching the PyTorch module.

    Default: zero-cost identity (returns the input unchanged).
    materialize=True: returns a fresh buffer; tiny inputs use an XLA copy
    (Pallas call overhead would dominate), larger inputs use the Pallas
    HBM->HBM DMA copy kernel.
    """
    if not materialize:
        return x
    nbytes = x.size * x.dtype.itemsize
    if nbytes < min_pallas_bytes:
        return jnp.copy(x)
    return _materialized_identity_copy(x)


if __name__ == "__main__":
    key = jax.random.PRNGKey(0)
    # Small DNA-feature-like batch: batch=2, channels=4, spatial=16x16.
    x = jax.random.normal(key, (2, 4, 16, 16), dtype=jnp.float32)

    # 1) Default zero-cost identity path.
    y_fast = jax.block_until_ready(identity_dna_feature_transformer(x))

    # 2) materialize=True at tiny size -> overhead-avoiding XLA copy path.
    y_xla_copy = jax.block_until_ready(
        identity_dna_feature_transformer(x, materialize=True)
    )

    # 3) Force the Pallas single-DMA kernel once (threshold overridden).
    y_pallas_single = jax.block_until_ready(
        identity_dna_feature_transformer(x, materialize=True, min_pallas_bytes=0)
    )

    # 4) Exercise the chunked start-all/wait-all DMA kernel (2 chunks).
    y_pallas_chunked = jax.block_until_ready(
        _materialized_identity_copy(x, force_chunks=2)
    )

    for y in (y_fast, y_xla_copy, y_pallas_single, y_pallas_chunked):
        assert y.shape == x.shape, (y.shape, x.shape)
        assert y.dtype == x.dtype, (y.dtype, x.dtype)
        assert bool(jnp.all(y == x)), "identity did not reproduce input exactly"

    print("KERNEL_OK")
</pallas_src>

<mosaic_0001>
module attributes {stable_mosaic.version = 11 : i64} {
  func.func @_single_copy_kernel(%arg0: memref<2x4x16x16xf32, #tpu.memory_space<any>>, %arg1: memref<2x4x16x16xf32, #tpu.memory_space<any>>, %arg2: memref<!tpu.dma_semaphore, #tpu.memory_space<semaphore_mem>>) attributes {dimension_semantics = [], scalar_prefetch = 0 : i64, scratch_operands = 1 : i64, tpu.core_type = #tpu.core_type<tc>} {
    tpu.enqueue_dma source(%arg0 : memref<2x4x16x16xf32, #tpu.memory_space<any>>) target(%arg1 : memref<2x4x16x16xf32, #tpu.memory_space<any>>) target_semaphore(%arg2 : memref<!tpu.dma_semaphore, #tpu.memory_space<semaphore_mem>>)
    tpu.wait_dma2 semaphore(%arg2 : memref<!tpu.dma_semaphore, #tpu.memory_space<semaphore_mem>>) src(%arg0 : memref<2x4x16x16xf32, #tpu.memory_space<any>>) dst(%arg1 : memref<2x4x16x16xf32, #tpu.memory_space<any>>)
    return
  }
}

</mosaic_0001>

<llo_original>
// kernel: tpu_custom_call.1
$region0: #{tpu_custom_call.1}
  #allocation0 [shape = 'u32[]', space=smem, size = 0x4, offset = 0x4, fixed_abs, tag = 'smem constant byte address 0x4 - core index']
  #allocation1 [shape = 'u32[72,128]{1,0:T(1,128)}', space=vmem, size = 0x9000, scoped, tag = 'internal scratch']
  #allocation2 [shape = 's32[1]{0}', space=sflag, size = 0x4, scoped, tag = 'scratch operand']
  #allocation3 [shape = 's32[]', space=sflag, size = 0x4, offset = 0, fixed_abs, tag = 'sflag constant byte address 0x0 - dummy sync flag']
  #allocation4 [shape = 'u32[0]{0}', space=smem, size = 0, offset = 0, fixed_abs, tag = 'smem constant byte address 0x0 - null']
  %s0 = inlined_call_operand.hbm [shape: f32[2,4,16,16], index: 0, kind: input, shape index: {}]
  %s1 = inlined_call_operand.hbm [shape: f32[2,4,16,16], index: 1, kind: output, shape index: {}]
  %s2 = sld [smem:[#allocation0]]
  $region2: #{tpu_custom_call.1} parent=0
    _
  %s4 = ssub.s32 1, %s2
  %s5 = scalar_select 0, %s4, %s2
  %s7 = sshll.u32 1, 14
  %s8 = sxor.u32 4294967295, %s7
  %s10 = sshll.u32 %s0, 4
  %s11 = int_to_ptr.hbm [resolvable:$true] %s10
  %s12 = sshll.u32 %s1, 4
  %s13 = int_to_ptr.hbm [resolvable:$true] %s12
  %16 = dma.general %s11, 2048, %s13, [#allocation2], [#allocation3], [#allocation4], 0, 0
  %s17 = smul.u32 2, 4
  %s18 = smul.u32 %s17, 16
  %s19 = smul.u32 %s18, 1
  %s20 = sshll.u32 %s19, 4
  %21 = dma.done [#allocation2], %s20
  %22 = vsyncmov [#allocation2]
  %s23 = vpop.sfrf %22
  %p24 = scmp.eq.s32.totalorder %s23, 0
  %p25 = pneg %p24
  %27 = shalt.err (%p25)

</llo_original>
